<compile_context>
chip_gen: v7x
topology: tpu7x:2x2x1
jax: 0.10.0
libtpu: 0.0.40
codegen_flags: <defaults>
</compile_context>

<pallas_src>
import functools
import math

import jax
import jax.numpy as jnp
from jax import lax
from jax.experimental import pallas as pl
from jax.experimental.pallas import tpu as pltpu


# ---------------------------------------------------------------------------
# Kernel
# ---------------------------------------------------------------------------
def make_arcface_kernel(cos_m, sin_m, th, mm, s):
    def arcface_kernel(emb_ref, w_ref, label_ref, out_ref, origin_ref):
        j = pl.program_id(1)  # tile index along out_features

        emb_n = emb_ref[...]                       # (TB, D), already L2-normalized
        w = w_ref[...]                             # (D, TN), matmul dtype

        # Column inverse norms from the VMEM-resident weight tile (no extra
        # HBM pass; f32 math so bf16 weights stay well-conditioned).
        w32 = w.astype(jnp.float32)
        col_sumsq = jnp.sum(w32 * w32, axis=0, keepdims=True)          # (1, TN)
        w_inv = lax.rsqrt(jnp.maximum(col_sumsq, 1e-12))

        # cos_theta = emb_n @ (w / ||w||): fold the column norm in post-matmul.
        cos_theta = jnp.dot(emb_n, w, preferred_element_type=jnp.float32)
        cos_theta = jnp.clip(cos_theta * w_inv, -1.0, 1.0)             # (TB, TN)

        tb, tn = cos_theta.shape
        lab_local = label_ref[...] - j * tn                            # (TB, 1)
        mask = lax.broadcasted_iota(jnp.int32, (tb, tn), 1) == lab_local

        # target_logit = cos_theta[row, label] for rows whose label lives in
        # this N tile (0 otherwise; the masked write below is then a no-op).
        target_logit = jnp.sum(jnp.where(mask, cos_theta, 0.0),
                               axis=1, keepdims=True)                  # (TB, 1)
        sin_theta = jnp.sqrt(jnp.maximum(1.0 - target_logit * target_logit, 0.0))
        cos_theta_m = target_logit * cos_m - sin_theta * sin_m
        # easy_margin=False branch of the PyTorch module.
        final_target_logit = jnp.where(target_logit > th, cos_theta_m,
                                       target_logit - mm)

        out = jnp.where(mask, final_target_logit, cos_theta)
        out_ref[...] = (out * s).astype(out_ref.dtype)
        origin_ref[...] = (cos_theta * s).astype(origin_ref.dtype)

    return arcface_kernel


# ---------------------------------------------------------------------------
# VMEM-aware tile selection
# ---------------------------------------------------------------------------
def _vmem_capacity_bytes():
    try:
        return int(pltpu.get_tpu_info().vmem_capacity_bytes)
    except Exception:
        return 64 << 20  # conservative: v7x per-TensorCore VMEM


def _divisor_tile(dim, preferred, align):
    """Largest multiple of `align` that divides `dim` and is <= preferred;
    falls back to `dim` itself (full extent) if none exists."""
    t = min(preferred, (dim // align) * align)
    while t >= align:
        if dim % t == 0:
            return t
        t -= align
    return dim


def _tile_vmem_bytes(tile_b, tile_n, D, mm_itemsize, origin_itemsize):
    w_buf = 2 * D * tile_n * mm_itemsize                 # weight tile, 2-buffered
    e_buf = 2 * tile_b * D * mm_itemsize                 # embedding tile, 2-buffered
    l_buf = 2 * tile_b * 4                               # labels
    out_buf = 2 * tile_b * tile_n * (4 + origin_itemsize)  # two outputs, 2-buffered
    # Epilogue temporaries: cos_theta, mask/iota, out, where temps (~4x f32 tile)
    tmp = 4 * tile_b * tile_n * 4
    # f32 copy of the weight tile for the in-kernel column-norm reduce.
    tmp += D * tile_n * 4
    return w_buf + e_buf + l_buf + out_buf + tmp


def _select_tiles(B, D, N, mm_itemsize, origin_itemsize, vmem_cap):
    budget = int(vmem_cap * 0.7)  # leave headroom for compiler scratch / spills
    # Batch-tile candidates: whole batch first (weight streamed exactly once),
    # then shrinking MXU/packing-friendly multiples.
    b_cands = []
    if B <= 2048:
        b_cands.append(B)
    for pref in (1024, 512, 256, 128, 64, 32, 16, 8):
        t = _divisor_tile(B, pref, 8)
        if t not in b_cands:
            b_cands.append(t)
    # Lane-dense N-tile candidates (multiples of 128, or full N as fallback).
    n_cands = []
    for pref in (4096, 2048, 1024, 512, 256, 128):
        t = _divisor_tile(N, pref, 128)
        if t not in n_cands:
            n_cands.append(t)
    for tb in b_cands:
        for tn in n_cands:
            if _tile_vmem_bytes(tb, tn, D, mm_itemsize, origin_itemsize) <= budget:
                return tb, tn
    return b_cands[-1], n_cands[-1]


# ---------------------------------------------------------------------------
# Wrappers
# ---------------------------------------------------------------------------
@functools.partial(jax.jit,
                   static_argnames=("margin", "rescale", "matmul_dtype",
                                    "origin_dtype", "tile_b", "tile_n",
                                    "vmem_cap"))
def _arcface_forward_jit(embeddings, kernel, label, *, margin, rescale,
                         matmul_dtype, origin_dtype, tile_b, tile_n, vmem_cap):
    B, D = embeddings.shape
    _, N = kernel.shape

    cos_m = math.cos(margin)
    sin_m = math.sin(margin)
    th = math.cos(math.pi - margin)
    mm = math.sin(math.pi - margin) * margin

    # Embedding L2-normalization hoisted to XLA: only B x D of work, keeps the
    # kernel scratch-free so both grid axes are embarrassingly parallel.
    emb32 = embeddings.astype(jnp.float32)
    inv = lax.rsqrt(jnp.maximum(jnp.sum(emb32 * emb32, axis=1, keepdims=True),
                                1e-12))
    emb_n = (emb32 * inv).astype(matmul_dtype)

    # Only cast the weight if needed (callers can cache a bf16 copy and avoid
    # this extra full-weight HBM pass every call).
    w_mx = kernel if kernel.dtype == jnp.dtype(matmul_dtype) \
        else kernel.astype(matmul_dtype)

    label2d = label.astype(jnp.int32).reshape(B, 1)

    grid = (B // tile_b, N // tile_n)

    mm_itemsize = jnp.dtype(matmul_dtype).itemsize
    o_itemsize = jnp.dtype(origin_dtype).itemsize
    est = _tile_vmem_bytes(tile_b, tile_n, D, mm_itemsize, o_itemsize)
    vmem_limit = max(int(est * 1.3) + (4 << 20), 32 << 20)
    vmem_limit = min(vmem_limit, int(vmem_cap * 0.9))   # stay below physical

    out_shapes = (
        jax.ShapeDtypeStruct((B, N), jnp.float32),       # margin logits * s
        jax.ShapeDtypeStruct((B, N), origin_dtype),      # original cos * s
    )

    fn = pl.pallas_call(
        make_arcface_kernel(cos_m, sin_m, th, mm, rescale),
        out_shape=out_shapes,
        grid_spec=pltpu.PrefetchScalarGridSpec(
            num_scalar_prefetch=0,
            grid=grid,
            in_specs=[
                pl.BlockSpec((tile_b, D), lambda i, j: (i, 0)),    # embeddings
                pl.BlockSpec((D, tile_n), lambda i, j: (0, j)),    # weight
                pl.BlockSpec((tile_b, 1), lambda i, j: (i, 0)),    # labels
            ],
            out_specs=[
                pl.BlockSpec((tile_b, tile_n), lambda i, j: (i, j)),
                pl.BlockSpec((tile_b, tile_n), lambda i, j: (i, j)),
            ],
        ),
        compiler_params=pltpu.CompilerParams(
            # No cross-iteration state: both axes can be megacore-sharded
            # (on v7x this splits the weight read and the output writeback).
            dimension_semantics=("parallel", "parallel"),
            vmem_limit_bytes=vmem_limit,
        ),
    )
    return fn(emb_n, w_mx, label2d)


def arcface_forward(embeddings, kernel, label, *, margin=0.5, rescale=64.0,
                    matmul_dtype=jnp.bfloat16, origin_dtype=jnp.float32,
                    tile_b=None, tile_n=None):
    """embeddings: (B, D), kernel: (D, N), label: (B,) int.

    Returns (output, origin_cos) = (cos(theta+m)-style logits * s, cos * s),
    matching the PyTorch ArcFace.forward (easy_margin=False).
    """
    B, D = embeddings.shape
    Dk, N = kernel.shape
    assert Dk == D, "kernel must be (in_features, out_features)"

    vmem_cap = _vmem_capacity_bytes()
    mm_itemsize = jnp.dtype(matmul_dtype).itemsize
    o_itemsize = jnp.dtype(origin_dtype).itemsize
    if tile_b is None or tile_n is None:
        auto_b, auto_n = _select_tiles(B, D, N, mm_itemsize, o_itemsize, vmem_cap)
        if tile_b is None:
            tile_b = auto_b
        if tile_n is None:
            tile_n = auto_n
    assert B % tile_b == 0, f"tile_b={tile_b} must divide batch B={B}"
    assert N % tile_n == 0, f"tile_n={tile_n} must divide out_features N={N}"

    return _arcface_forward_jit(
        embeddings, kernel, label,
        margin=margin, rescale=rescale,
        matmul_dtype=matmul_dtype, origin_dtype=origin_dtype,
        tile_b=tile_b, tile_n=tile_n, vmem_cap=vmem_cap)


# ---------------------------------------------------------------------------
# Pure-JAX reference mirroring the PyTorch module
# ---------------------------------------------------------------------------
def reference_forward(embeddings, kernel, label, *, margin=0.5, rescale=64.0):
    cos_m = math.cos(margin)
    sin_m = math.sin(margin)
    th = math.cos(math.pi - margin)
    mm = math.sin(math.pi - margin) * margin

    emb = embeddings / jnp.linalg.norm(embeddings, axis=1, keepdims=True)
    w = kernel / jnp.linalg.norm(kernel, axis=0, keepdims=True)
    cos_theta = jnp.clip(emb @ w, -1.0, 1.0)
    origin = cos_theta
    B = emb.shape[0]
    tl = cos_theta[jnp.arange(B), label][:, None]
    sin_theta = jnp.sqrt(jnp.maximum(1.0 - tl * tl, 0.0))
    ctm = tl * cos_m - sin_theta * sin_m
    ftl = jnp.where(tl > th, ctm, tl - mm)
    out = cos_theta.at[jnp.arange(B), label].set(ftl[:, 0])
    return out * rescale, origin * rescale


# ---------------------------------------------------------------------------
# Demo / self-test
# ---------------------------------------------------------------------------
if __name__ == "__main__":
    B, D, N = 16, 32, 256          # batch, in_features, out_features (small)
    key = jax.random.PRNGKey(0)
    k_emb, k_ker, k_lab = jax.random.split(key, 3)

    embeddings = jax.random.normal(k_emb, (B, D), dtype=jnp.float32)

    # xavier_uniform_ init for kernel (in_features, out_features)
    limit = math.sqrt(6.0 / (D + N))
    kernel = jax.random.uniform(k_ker, (D, N), dtype=jnp.float32,
                                minval=-limit, maxval=limit)

    label = jax.random.randint(k_lab, (B,), 0, N, dtype=jnp.int32)

    ref_out, ref_origin = reference_forward(embeddings, kernel, label,
                                            margin=0.5, rescale=64.0)

    # 1) f32 matmul path, forced small tiles -> exercises the (2, 2) grid and
    #    the cross-tile label gather/scatter handling.
    out, origin = arcface_forward(embeddings, kernel, label,
                                  margin=0.5, rescale=64.0,
                                  matmul_dtype=jnp.float32,
                                  tile_b=8, tile_n=128)
    jax.block_until_ready((out, origin))
    assert jnp.allclose(out, ref_out, atol=2e-3, rtol=1e-3)
    assert jnp.allclose(origin, ref_origin, atol=2e-3, rtol=1e-3)

    # 2) Default path: bf16 matmul (halved weight DMA), auto VMEM-aware tiles,
    #    f32 outputs (module-exact semantics).
    out_bf, origin_bf = arcface_forward(embeddings, kernel, label,
                                        margin=0.5, rescale=64.0)
    jax.block_until_ready((out_bf, origin_bf))
    assert jnp.allclose(out_bf, ref_out, atol=0.5, rtol=0.02)
    assert jnp.allclose(origin_bf, ref_origin, atol=0.5, rtol=0.02)

    # 3) Fully byte-lean path: weight pre-cast to bf16 once (cached across
    #    calls -> no per-call cast pass) and bf16 'origin' writeback.
    kernel_bf16 = kernel.astype(jnp.bfloat16)
    out_bo, origin_bo = arcface_forward(embeddings, kernel_bf16, label,
                                        margin=0.5, rescale=64.0,
                                        matmul_dtype=jnp.bfloat16,
                                        origin_dtype=jnp.bfloat16)
    jax.block_until_ready((out_bo, origin_bo))
    assert jnp.allclose(out_bo, ref_out, atol=0.5, rtol=0.02)
    assert jnp.allclose(origin_bo.astype(jnp.float32), ref_origin,
                        atol=0.5, rtol=0.02)

    print("KERNEL_OK")
</pallas_src>

<mosaic_0001>
module attributes {stable_mosaic.version = 11 : i64} {
  func.func @arcface_kernel(%arg0: i32, %arg1: i32, %arg2: memref<8x32xf32, #tpu.memory_space<vmem>>, %arg3: memref<32x128xf32, #tpu.memory_space<vmem>>, %arg4: memref<8x1xi32, #tpu.memory_space<vmem>>, %arg5: memref<8x128xf32, #tpu.memory_space<vmem>>, %arg6: memref<8x128xf32, #tpu.memory_space<vmem>>) attributes {dimension_semantics = [#tpu.dimension_semantics<parallel>, #tpu.dimension_semantics<parallel>], iteration_bounds = array<i64: 2, 2>, scalar_prefetch = 0 : i64, scratch_operands = 0 : i64, tpu.core_type = #tpu.core_type<tc>, window_params = [{transform_indices = @transform_0, window_bounds = array<i64: 8, 32>}, {transform_indices = @transform_1, window_bounds = array<i64: 32, 128>}, {transform_indices = @transform_2, window_bounds = array<i64: 8, 1>}, {transform_indices = @transform_3, window_bounds = array<i64: 8, 128>}, {transform_indices = @transform_4, window_bounds = array<i64: 8, 128>}]} {
    %c0 = arith.constant 0 : index
    %c0_0 = arith.constant 0 : index
    %0 = vector.load %arg2[%c0, %c0_0] : memref<8x32xf32, #tpu.memory_space<vmem>>, vector<8x32xf32>
    %c0_1 = arith.constant 0 : index
    %c0_2 = arith.constant 0 : index
    %1 = vector.load %arg3[%c0_1, %c0_2] : memref<32x128xf32, #tpu.memory_space<vmem>>, vector<32x128xf32>
    %2 = arith.mulf %1, %1 : vector<32x128xf32>
    %cst = arith.constant dense<0.000000e+00> : vector<128xf32>
    %3 = vector.multi_reduction <add>, %2, %cst [0] : vector<32x128xf32> to vector<128xf32>
    %4 = vector.shape_cast %3 : vector<128xf32> to vector<1x128xf32>
    %cst_3 = arith.constant 9.99999996E-13 : f32
    %5 = vector.broadcast %cst_3 : f32 to vector<1x128xf32>
    %6 = arith.maximumf %4, %5 : vector<1x128xf32>
    %7 = math.rsqrt %6 : vector<1x128xf32>
    %cst_4 = arith.constant dense<0.000000e+00> : vector<8x128xf32>
    %8 = tpu.matmul %0, %1, %cst_4 {dimension_numbers = #tpu.dot_dimension_numbers<[1], [0], [0], [1], [0, 0, 1, 1], [], []>} : vector<8x32xf32>, vector<32x128xf32>, vector<8x128xf32> -> vector<8x128xf32>
    %9 = vector.broadcast %7 : vector<1x128xf32> to vector<8x128xf32>
    %10 = arith.mulf %8, %9 : vector<8x128xf32>
    %cst_5 = arith.constant -1.000000e+00 : f32
    %cst_6 = arith.constant 1.000000e+00 : f32
    %11 = vector.broadcast %cst_5 : f32 to vector<8x128xf32>
    %12 = arith.maximumf %11, %10 : vector<8x128xf32>
    %13 = vector.broadcast %cst_6 : f32 to vector<8x128xf32>
    %14 = arith.minimumf %13, %12 : vector<8x128xf32>
    %c0_7 = arith.constant 0 : index
    %c0_8 = arith.constant 0 : index
    %15 = vector.load %arg4[%c0_7, %c0_8] : memref<8x1xi32, #tpu.memory_space<vmem>>, vector<8x1xi32>
    %c128_i32 = arith.constant 128 : i32
    %16 = arith.muli %arg1, %c128_i32 : i32
    %17 = vector.broadcast %16 : i32 to vector<8x1xi32>
    %18 = arith.subi %15, %17 : vector<8x1xi32>
    %19 = tpu.iota {dimensions = array<i32: 1>} : vector<8x128xi32>
    %20 = vector.broadcast %18 : vector<8x1xi32> to vector<8x128xi32>
    %21 = arith.cmpi eq, %19, %20 : vector<8x128xi32>
    %cst_9 = arith.constant 0.000000e+00 : f32
    %22 = vector.broadcast %cst_9 : f32 to vector<8x128xf32>
    %23 = arith.select %21, %14, %22 : vector<8x128xi1>, vector<8x128xf32>
    %cst_10 = arith.constant dense<0.000000e+00> : vector<8xf32>
    %24 = vector.multi_reduction <add>, %23, %cst_10 [1] : vector<8x128xf32> to vector<8xf32>
    %25 = vector.shape_cast %24 : vector<8xf32> to vector<8x1xf32>
    %26 = arith.mulf %25, %25 : vector<8x1xf32>
    %cst_11 = arith.constant 1.000000e+00 : f32
    %27 = vector.broadcast %cst_11 : f32 to vector<8x1xf32>
    %28 = arith.subf %27, %26 : vector<8x1xf32>
    %cst_12 = arith.constant 0.000000e+00 : f32
    %29 = vector.broadcast %cst_12 : f32 to vector<8x1xf32>
    %30 = arith.maximumf %28, %29 : vector<8x1xf32>
    %31 = math.sqrt %30 : vector<8x1xf32>
    %cst_13 = arith.constant 0.87758255 : f32
    %32 = vector.broadcast %cst_13 : f32 to vector<8x1xf32>
    %33 = arith.mulf %25, %32 : vector<8x1xf32>
    %cst_14 = arith.constant 0.47942555 : f32
    %34 = vector.broadcast %cst_14 : f32 to vector<8x1xf32>
    %35 = arith.mulf %31, %34 : vector<8x1xf32>
    %36 = arith.subf %33, %35 : vector<8x1xf32>
    %cst_15 = arith.constant -0.87758255 : f32
    %37 = vector.broadcast %cst_15 : f32 to vector<8x1xf32>
    %38 = arith.cmpf ogt, %25, %37 : vector<8x1xf32>
    %cst_16 = arith.constant 0.239712775 : f32
    %39 = vector.broadcast %cst_16 : f32 to vector<8x1xf32>
    %40 = arith.subf %25, %39 : vector<8x1xf32>
    %41 = arith.select %38, %36, %40 : vector<8x1xi1>, vector<8x1xf32>
    %42 = vector.shape_cast %41 : vector<8x1xf32> to vector<8x1xf32>
    %43 = vector.broadcast %42 : vector<8x1xf32> to vector<8x128xf32>
    %44 = arith.select %21, %43, %14 : vector<8x128xi1>, vector<8x128xf32>
    %cst_17 = arith.constant 6.400000e+01 : f32
    %45 = vector.broadcast %cst_17 : f32 to vector<8x128xf32>
    %46 = arith.mulf %44, %45 : vector<8x128xf32>
    %c0_18 = arith.constant 0 : index
    %c0_19 = arith.constant 0 : index
    %47 = vector.load %arg5[%c0_18, %c0_19] : memref<8x128xf32, #tpu.memory_space<vmem>>, vector<8x128xf32>
    tpu.vector_store %arg5[%c0_18, %c0_19], %46 {strides = array<i32>} : memref<8x128xf32, #tpu.memory_space<vmem>>, vector<8x128xf32>,
    %cst_20 = arith.constant 6.400000e+01 : f32
    %48 = vector.broadcast %cst_20 : f32 to vector<8x128xf32>
    %49 = arith.mulf %14, %48 : vector<8x128xf32>
    %c0_21 = arith.constant 0 : index
    %c0_22 = arith.constant 0 : index
    %50 = vector.load %arg6[%c0_21, %c0_22] : memref<8x128xf32, #tpu.memory_space<vmem>>, vector<8x128xf32>
    tpu.vector_store %arg6[%c0_21, %c0_22], %49 {strides = array<i32>} : memref<8x128xf32, #tpu.memory_space<vmem>>, vector<8x128xf32>,
    return
  }
  func.func @transform_0(%arg0: i32, %arg1: i32) -> (i32, i32) {
    %c0_i32 = arith.constant 0 : i32
    %c0_i32_0 = arith.constant 0 : i32
    return %arg0, %c0_i32 : i32, i32
  }
  func.func @transform_1(%arg0: i32, %arg1: i32) -> (i32, i32) {
    %c0_i32 = arith.constant 0 : i32
    %c0_i32_0 = arith.constant 0 : i32
    return %c0_i32, %arg1 : i32, i32
  }
  func.func @transform_2(%arg0: i32, %arg1: i32) -> (i32, i32) {
    %c0_i32 = arith.constant 0 : i32
    %c0_i32_0 = arith.constant 0 : i32
    return %arg0, %c0_i32 : i32, i32
  }
  func.func @transform_3(%arg0: i32, %arg1: i32) -> (i32, i32) {
    %c0_i32 = arith.constant 0 : i32
    return %arg0, %arg1 : i32, i32
  }
  func.func @transform_4(%arg0: i32, %arg1: i32) -> (i32, i32) {
    %c0_i32 = arith.constant 0 : i32
    return %arg0, %arg1 : i32, i32
  }
}

</mosaic_0001>

<llo_original>
// kernel: _arcface_forward_jit.1
$region0: #{_arcface_forward_jit.1}
  #allocation0 [shape = 'u32[]', space=smem, size = 0x4, offset = 0x4, fixed_abs, tag = 'smem constant byte address 0x4 - core index']
  #allocation1 [shape = 'u32[144,128]{1,0:T(1,128)}', space=vmem, size = 0x12000, scoped, tag = 'internal scratch']
  %s0 = inlined_call_operand.vmem [shape: f32[16,32], index: 0, kind: input, shape index: {}]
  %s1 = inlined_call_operand.vmem [shape: f32[32,256], index: 1, kind: input, shape index: {}]
  %s2 = inlined_call_operand.vmem [shape: s32[16,1], index: 2, kind: input, shape index: {}]
  %s3 = inlined_call_operand.hbm [shape: f32[16,256], index: 3, kind: output, shape index: {0}]
  %s4 = inlined_call_operand.hbm [shape: f32[16,256], index: 4, kind: output, shape index: {1}]
  %5 = xla_tuple %s3, %s4
  %s6 = sld [smem:[#allocation0]]
  $region91: #{_arcface_forward_jit.1} parent=0
    _
  %s8 = ssub.s32 1, %s6
  %s9 = scalar_select 0, %s8, %s6
  $region1: #{_arcface_forward_jit.1} parent=0
    #allocation2 [shape = 'u8[32768]{0}', space=vmem, size = 0x8000, scoped, tag = 'input window, operand 1']
    #allocation3 [shape = 'u8[8192]{0}', space=vmem, size = 0x2000, scoped, tag = 'output window, operand 0']
    #allocation4 [shape = 's32[2]{0}', space=sflag, size = 0x8, scoped, tag = 'scoped memory for _arcface_forward_jit.1']
    #allocation5 [shape = 'u8[8192]{0}', space=vmem, size = 0x2000, scoped, tag = 'output window, operand 1']
    #allocation6 [shape = 's32[2]{0}', space=sflag, size = 0x8, scoped, tag = 'scoped memory for _arcface_forward_jit.1']
    %10 = vsyncpa [#allocation4], 0
    %s11 = scalar_lea.sflag [#allocation4], 1
    %12 = vsyncpa %s11, 0
    %13 = vsyncpa [#allocation6], 0
    %s14 = scalar_lea.sflag [#allocation6], 1
    %15 = vsyncpa %s14, 0
    loop: start=0, step=1, limit=6
    $region2: #{_arcface_forward_jit.1} parent=1 // loop_pre_header
      _
    $region3: #{_arcface_forward_jit.1} parent=1 // loop_header
      %s17 = sphi 0, %s21
      %p18 = scmp.ge.s32.totalorder %s17, 6
      %s24 = sphi 0, %s36
      %s25 = sphi 0, %s32
      %s26 = sphi 0, %s24
      %s27 = sphi 0, %s25
      %s28 = sphi 0, %s26
      %s29 = sphi 0, %s27
      %s39 = sphi 0, %s41
      %s42 = sphi 0, %s39
      %s43 = sphi 0, %s42
      %s59 = sphi 0, %s43
      %s65 = sphi 0, %s67
      %s68 = sphi 0, %s65
      %s69 = sphi 0, %s68
      %s85 = sphi 0, %s69
      %s91 = sphi 0, %s93
      %s94 = sphi 0, %s91
      %s95 = sphi 0, %s94
      %s111 = sphi 0, %s95
      %s119 = sphi 0, %s121
      %s122 = sphi 0, %s119
      %s123 = sphi 0, %s122
      %s139 = sphi 0, %s123
      %s147 = sphi 0, %s149
      %s150 = sphi 0, %s147
      %s151 = sphi 0, %s150
      %s167 = sphi 0, %s151
    $region4: #{_arcface_forward_jit.1} parent=1 // loop_header_branch
      %20 = sbr.rel (%p18) target = $region8
    $region5: #{_arcface_forward_jit.1} parent=1 // loop_body
      %s22 = ssub.s32 %s17, 1
      %s23 = ssub.s32 %s17, 2
      %s30 = sadd.s32 1, %s25
      %p31 = scmp.ge.s32.totalorder %s30, 2
      %s32 = scalar_select %p31, 0, %s30
      %s33 = sadd.s32 1, %s24
      %s34 = scalar_select %p31, %s33, %s24
      %p35 = scmp.ge.s32.totalorder %s34, 2
      %s36 = scalar_select %p35, 0, %s34
      %s37 = ssub.s32 %s24, %s36
      %p38 = scmp.eq.s32.totalorder %s37, 0
      %s40 = sadd.s32 %s39, 1
      %s41 = scalar_select %p38, %s39, %s40
      %p44 = pneg %p38
      %p45 = scmp.eq.s32.totalorder %s17, 3
      %p46 = por %p44, %p45
      %p47 = scmp.ne.s32.totalorder %s39, %s42
      %p48 = scmp.eq.s32.totalorder %s17, 0
      %p49 = por %p47, %p48
      %p50 = scmp.ne.s32.totalorder %s39, %s42
      %p51 = scmp.eq.s32.totalorder %s22, 3
      %p52 = por %p50, %p51
      %p53 = scmp.ne.s32.totalorder %s42, %s43
      %p54 = scmp.eq.s32.totalorder %s22, 0
      %p55 = por %p53, %p54
      %p56 = scmp.ne.s32.totalorder %s42, %s43
      %p57 = scmp.eq.s32.totalorder %s23, 3
      %p58 = por %p56, %p57
      %p60 = scmp.ne.s32.totalorder %s43, %s59
      %p61 = scmp.eq.s32.totalorder %s23, 0
      %p62 = por %p60, %p61
      %s63 = ssub.s32 %s25, %s32
      %p64 = scmp.eq.s32.totalorder %s63, 0
      %s66 = sadd.s32 %s65, 1
      %s67 = scalar_select %p64, %s65, %s66
      %p70 = pneg %p64
      %p71 = scmp.eq.s32.totalorder %s17, 3
      %p72 = por %p70, %p71
      %p73 = scmp.ne.s32.totalorder %s65, %s68
      %p74 = scmp.eq.s32.totalorder %s17, 0
      %p75 = por %p73, %p74
      %p76 = scmp.ne.s32.totalorder %s65, %s68
      %p77 = scmp.eq.s32.totalorder %s22, 3
      %p78 = por %p76, %p77
      %p79 = scmp.ne.s32.totalorder %s68, %s69
      %p80 = scmp.eq.s32.totalorder %s22, 0
      %p81 = por %p79, %p80
      %p82 = scmp.ne.s32.totalorder %s68, %s69
      %p83 = scmp.eq.s32.totalorder %s23, 3
      %p84 = por %p82, %p83
      %p86 = scmp.ne.s32.totalorder %s69, %s85
      %p87 = scmp.eq.s32.totalorder %s23, 0
      %p88 = por %p86, %p87
      %s89 = ssub.s32 %s24, %s36
      %p90 = scmp.eq.s32.totalorder %s89, 0
      %s92 = sadd.s32 %s91, 1
      %s93 = scalar_select %p90, %s91, %s92
      %p96 = pneg %p90
      %p97 = scmp.eq.s32.totalorder %s17, 3
      %p98 = por %p96, %p97
      %p99 = scmp.ne.s32.totalorder %s91, %s94
      %p100 = scmp.eq.s32.totalorder %s17, 0
      %p101 = por %p99, %p100
      %p102 = scmp.ne.s32.totalorder %s91, %s94
      %p103 = scmp.eq.s32.totalorder %s22, 3
      %p104 = por %p102, %p103
      %p105 = scmp.ne.s32.totalorder %s94, %s95
      %p106 = scmp.eq.s32.totalorder %s22, 0
      %p107 = por %p105, %p106
      %p108 = scmp.ne.s32.totalorder %s94, %s95
      %p109 = scmp.eq.s32.totalorder %s23, 3
      %p110 = por %p108, %p109
      %p112 = scmp.ne.s32.totalorder %s95, %s111
      %p113 = scmp.eq.s32.totalorder %s23, 0
      %p114 = por %p112, %p113
      %s115 = ssub.s32 %s24, %s36
      %s116 = ssub.s32 %s25, %s32
      %s117 = sor.u32 %s115, %s116
      %p118 = scmp.eq.s32.totalorder %s117, 0
      %s120 = sadd.s32 %s119, 1
      %s121 = scalar_select %p118, %s119, %s120
      %p124 = pneg %p118
      %p125 = scmp.eq.s32.totalorder %s17, 3
      %p126 = por %p124, %p125
      %p127 = scmp.ne.s32.totalorder %s119, %s122
      %p128 = scmp.eq.s32.totalorder %s17, 0
      %p129 = por %p127, %p128
      %p130 = scmp.ne.s32.totalorder %s119, %s122
      %p131 = scmp.eq.s32.totalorder %s22, 3
      %p132 = por %p130, %p131
      %p133 = scmp.ne.s32.totalorder %s122, %s123
      %p134 = scmp.eq.s32.totalorder %s22, 0
      %p135 = por %p133, %p134
      %p136 = scmp.ne.s32.totalorder %s122, %s123
      %p137 = scmp.eq.s32.totalorder %s23, 3
      %p138 = por %p136, %p137
      %p140 = scmp.ne.s32.totalorder %s123, %s139
      %p141 = scmp.eq.s32.totalorder %s23, 0
      %p142 = por %p140, %p141
      %s143 = ssub.s32 %s24, %s36
      %s144 = ssub.s32 %s25, %s32
      %s145 = sor.u32 %s143, %s144
      %p146 = scmp.eq.s32.totalorder %s145, 0
      %s148 = sadd.s32 %s147, 1
      %s149 = scalar_select %p146, %s147, %s148
      %p152 = pneg %p146
      %p153 = scmp.eq.s32.totalorder %s17, 3
      %p154 = por %p152, %p153
      %p155 = scmp.ne.s32.totalorder %s147, %s150
      %p156 = scmp.eq.s32.totalorder %s17, 0
      %p157 = por %p155, %p156
      %p158 = scmp.ne.s32.totalorder %s147, %s150
      %p159 = scmp.eq.s32.totalorder %s22, 3
      %p160 = por %p158, %p159
      %p161 = scmp.ne.s32.totalorder %s150, %s151
      %p162 = scmp.eq.s32.totalorder %s22, 0
      %p163 = por %p161, %p162
      %p164 = scmp.ne.s32.totalorder %s150, %s151
      %p165 = scmp.eq.s32.totalorder %s23, 3
      %p166 = por %p164, %p165
      %p168 = scmp.ne.s32.totalorder %s151, %s167
      %p169 = scmp.eq.s32.totalorder %s23, 0
      %p170 = por %p168, %p169
      %p171 = scmp.le.s32.totalorder 1, %s17
      %p172 = scmp.lt.s32.totalorder %s17, 5
      %p173 = pnand %p171, %p172
      %p174 = pneg %p173
      // Predicated region
      $region9: #{_arcface_forward_jit.1} parent=5 // pred_check
        _
      $region10: #{_arcface_forward_jit.1} parent=5 // pred_check_branch
        %176 = sbr.rel (%p173) target = $region12
      $region11: #{_arcface_forward_jit.1} parent=5 // pred_region
        %s177 = ssub.s32 %s17, 1
      $region12: #{_arcface_forward_jit.1} parent=5 // pred_fallthru
        _
      %p178 = scmp.lt.s32.totalorder %s17, 4
      // Predicated region
      $region13: #{_arcface_forward_jit.1} parent=5 // pred_check
        %p179 = pneg %p178
      $region14: #{_arcface_forward_jit.1} parent=5 // pred_check_branch
        %181 = sbr.rel (%p179) target = $region16
      $region15: #{_arcface_forward_jit.1} parent=5 // pred_region
        // Predicated region
        $region17: #{_arcface_forward_jit.1} parent=15 // pred_check
          %p182 = pneg %p49
        $region18: #{_arcface_forward_jit.1} parent=15 // pred_check_branch
          %184 = sbr.rel (%p182) target = $region20
        $region19: #{_arcface_forward_jit.1} parent=15 // pred_region
          %p185 = scmp.lt.s32.totalorder %s24, 1
          %s186 = scalar_select %p185, %s24, 1
          %s187 = smul.addr %s186, 8
          %s188 = scalar_lea.vmem %s0, %s187
        $region20: #{_arcface_forward_jit.1} parent=15 // pred_fallthru
          _
        // Predicated region
        $region21: #{_arcface_forward_jit.1} parent=15 // pred_check
          %p189 = pneg %p75
        $region22: #{_arcface_forward_jit.1} parent=15 // pred_check_branch
          %191 = sbr.rel (%p189) target = $region24
        $region23: #{_arcface_forward_jit.1} parent=15 // pred_region
          %s192 = sand.u32 %s65, 1
          %s193 = sand.u32 %s65, 1
          %s194 = smul.addr %s193, 32
          %s195 = scalar_lea.vmem [#allocation2], %s194
          %s196 = smul.addr %s25, 8
          %s197 = scalar_lea.vmem %s1, %s196
          // Predicated region
          $region25: #{_arcface_forward_jit.1} parent=23 // pred_check
            _
          $region26: #{_arcface_forward_jit.1} parent=23 // pred_check_branch
            %199 = sbr.rel (0) target = $region28
          $region27: #{_arcface_forward_jit.1} parent=23 // pred_region
            // Predicated region
            $region29: #{_arcface_forward_jit.1} parent=27 // pred_check
              _
            $region30: #{_arcface_forward_jit.1} parent=27 // pred_check_branch
              %201 = sbr.rel (0) target = $region32
            $region31: #{_arcface_forward_jit.1} parent=27 // pred_region
              // Predicated region
              $region44: #{_arcface_forward_jit.1} parent=31 // pred_check
                _
              $region45: #{_arcface_forward_jit.1} parent=31 // pred_check_branch
                %222 = sbr.rel (0) target = $region47
              $region46: #{_arcface_forward_jit.1} parent=31 // pred_region
                loop: start=0, step=1, limit=1
                $region48: #{_arcface_forward_jit.1} parent=46 // loop_pre_header
                  _
                $region49: #{_arcface_forward_jit.1} parent=46 // loop_header
                  %s224 = sphi 0, %s228
                  %p225 = scmp.ge.s32.totalorder %s224, 1
                  %s229 = sphi %s197, %s197
                  %s230 = sphi %s195, %s195
                $region50: #{_arcface_forward_jit.1} parent=46 // loop_header_branch
                  %227 = sbr.rel (%p225) target = $region54
                $region51: #{_arcface_forward_jit.1} parent=46 // loop_body
                  %v231 = vld [vmem:[%s229] sm:$0xff]
                  %232 = vst [vmem:[%s230] sm:$0xff] %v231
                  %v233 = vld [vmem:[%s229 + $0x10] sm:$0xff]
                  %234 = vst [vmem:[%s230 + $0x8] sm:$0xff] %v233
                  %v235 = vld [vmem:[%s229 + $0x20] sm:$0xff]
                  %236 = vst [vmem:[%s230 + $0x10] sm:$0xff] %v235
                  %v237 = vld [vmem:[%s229 + $0x30] sm:$0xff]
                  %238 = vst [vmem:[%s230 + $0x18] sm:$0xff] %v237
                $region52: #{_arcface_forward_jit.1} parent=46 // loop_footer
                  %s228 = sadd.s32 1, %s224
                $region53: #{_arcface_forward_jit.1} parent=46 // loop_footer_branch
                  %223 = sbr.rel target = $region49
                $region54: #{_arcface_forward_jit.1} parent=46 // loop_exit
                  _
              $region47: #{_arcface_forward_jit.1} parent=31 // pred_fallthru
                _
              // Predicated region
              $region55: #{_arcface_forward_jit.1} parent=31 // pred_check
                _
              $region56: #{_arcface_forward_jit.1} parent=31 // pred_check_branch
                %240 = sbr.rel target = $region58
              $region57: #{_arcface_forward_jit.1} parent=31 // pred_region
                _
              $region58: #{_arcface_forward_jit.1} parent=31 // pred_fallthru
                _
            $region32: #{_arcface_forward_jit.1} parent=27 // pred_fallthru
              _
            // Predicated region
            $region33: #{_arcface_forward_jit.1} parent=27 // pred_check
              _
            $region34: #{_arcface_forward_jit.1} parent=27 // pred_check_branch
              %203 = sbr.rel target = $region36
            $region35: #{_arcface_forward_jit.1} parent=27 // pred_region
              loop: start=0, step=1, limit=1
              $region37: #{_arcface_forward_jit.1} parent=35 // loop_pre_header
                _
              $region38: #{_arcface_forward_jit.1} parent=35 // loop_header
                %s206 = sphi 0, %s210
                %p207 = scmp.ge.s32.totalorder %s206, 1
                %s211 = sphi %s197, %s197
                %s212 = sphi %s195, %s195
              $region39: #{_arcface_forward_jit.1} parent=35 // loop_header_branch
                %209 = sbr.rel (%p207) target = $region43
              $region40: #{_arcface_forward_jit.1} parent=35 // loop_body
                %v213 = vld [vmem:[%s211] sm:$0xff]
                %214 = vst [vmem:[%s212] sm:$0xff] %v213
                %v215 = vld [vmem:[%s211 + $0x10] sm:$0xff]
                %216 = vst [vmem:[%s212 + $0x8] sm:$0xff] %v215
                %v217 = vld [vmem:[%s211 + $0x20] sm:$0xff]
                %218 = vst [vmem:[%s212 + $0x10] sm:$0xff] %v217
                %v219 = vld [vmem:[%s211 + $0x30] sm:$0xff]
                %220 = vst [vmem:[%s212 + $0x18] sm:$0xff] %v219
              $region41: #{_arcface_forward_jit.1} parent=35 // loop_footer
                %s210 = sadd.s32 1, %s206
              $region42: #{_arcface_forward_jit.1} parent=35 // loop_footer_branch
                %205 = sbr.rel target = $region38
              $region43: #{_arcface_forward_jit.1} parent=35 // loop_exit
                _
            $region36: #{_arcface_forward_jit.1} parent=27 // pred_fallthru
              _
          $region28: #{_arcface_forward_jit.1} parent=23 // pred_fallthru
            _
          %241 = vnop
        $region24: #{_arcface_forward_jit.1} parent=15 // pred_fallthru
          _
        // Predicated region
        $region59: #{_arcface_forward_jit.1} parent=15 // pred_check
          %p242 = pneg %p101
        $region60: #{_arcface_forward_jit.1} parent=15 // pred_check_branch
          %244 = sbr.rel (%p242) target = $region62
        $region61: #{_arcface_forward_jit.1} parent=15 // pred_region
          %p245 = scmp.lt.s32.totalorder %s24, 1
          %s246 = scalar_select %p245, %s24, 1
          %s247 = smul.addr %s246, 8
          %s248 = scalar_lea.vmem %s2, %s247
        $region62: #{_arcface_forward_jit.1} parent=15 // pred_fallthru
          _
      $region16: #{_arcface_forward_jit.1} parent=5 // pred_fallthru
        _
      %p249 = scmp.le.s32.totalorder 1, %s17
      %p250 = scmp.lt.s32.totalorder %s17, 5
      %p251 = pnand %p249, %p250
      %p252 = pneg %p251
      // Predicated region
      $region63: #{_arcface_forward_jit.1} parent=5 // pred_check
        _
      $region64: #{_arcface_forward_jit.1} parent=5 // pred_check_branch
        %254 = sbr.rel (%p251) target = $region66
      $region65: #{_arcface_forward_jit.1} parent=5 // pred_region
        %s255 = ssub.s32 %s17, 1
        %s256 = sand.u32 %s68, 1
        %s257 = sand.u32 %s68, 1
        %s258 = smul.addr %s257, 32
        %s259 = scalar_lea.vmem [#allocation2], %s258
        // Predicated region
        $region67: #{_arcface_forward_jit.1} parent=65 // pred_check
          %p260 = pneg %p81
        $region68: #{_arcface_forward_jit.1} parent=65 // pred_check_branch
          %262 = sbr.rel (%p260) target = $region70
        $region69: #{_arcface_forward_jit.1} parent=65 // pred_region
          _
        $region70: #{_arcface_forward_jit.1} parent=65 // pred_fallthru
          _
        %p263 = scmp.lt.s32.totalorder %s26, 1
        %s264 = scalar_select %p263, %s26, 1
        %s265 = smul.addr %s264, 8
        %s266 = scalar_lea.vmem %s0, %s265
        %p267 = pneg %p55
        %p268 = pneg %p52
        %s269 = sand.u32 %s68, 1
        %s270 = sand.u32 %s68, 1
        %s271 = smul.addr %s270, 32
        %s272 = scalar_lea.vmem [#allocation2], %s271
        %p273 = pneg %p81
        %p274 = pneg %p78
        %p275 = scmp.lt.s32.totalorder %s26, 1
        %s276 = scalar_select %p275, %s26, 1
        %s277 = smul.addr %s276, 8
        %s278 = scalar_lea.vmem %s2, %s277
        %p279 = pneg %p107
        %p280 = pneg %p104
        %p281 = pneg %p135
        %p282 = pneg %p132
        %s283 = sand.u32 %s122, 1
        %s284 = scalar_lea.sflag [#allocation4], %s283
        %s285 = sand.u32 %s122, 1
        %s286 = smul.addr %s285, 8
        %s287 = scalar_lea.vmem [#allocation3], %s286
        %p288 = pneg %p163
        %p289 = pneg %p160
        %s290 = sand.u32 %s150, 1
        %s291 = scalar_lea.sflag [#allocation6], %s290
        %s292 = sand.u32 %s150, 1
        %s293 = smul.addr %s292, 8
        %s294 = scalar_lea.vmem [#allocation5], %s293
        %p295 = scmp.lt.s32.totalorder %s26, 1
        %s296 = scalar_select %p295, %s26, 1
        %s297 = smul.addr %s296, 8
        %s298 = scalar_lea.vmem %s0, %s297
        %p299 = scmp.lt.s32.totalorder %s26, 1
        %s300 = scalar_select %p299, %s26, 1
        %s301 = smul.addr %s300, 8
        %s302 = scalar_lea.vmem %s2, %s301
        %v303 = vld [vmem:[%s298] sm:$0xff]
        %v304 = vld [vmem:[%s259] sm:$0xff]
        %v305 = vld [vmem:[%s259 + $0x8] sm:$0xff]
        %v306 = vld [vmem:[%s259 + $0x10] sm:$0xff]
        %v307 = vld [vmem:[%s259 + $0x18] sm:$0xff]
        %v308 = vmul.f32 %v304, %v304
        %v309 = vmul.f32 %v305, %v305
        %v310 = vmul.f32 %v306, %v306
        %v311 = vmul.f32 %v307, %v307
        %v312 = vadd.f32 %v308, %v309
        %v313 = vadd.f32 %v312, %v310
        %v314 = vadd.f32 %v313, %v311
        %v315 = vrot.slane %v314, 4
        %v316 = vadd.f32 %v314, %v315
        %v317 = vrot.slane %v316, 2
        %v318 = vadd.f32 %v316, %v317
        %v319 = vrot.slane %v318, 1
        %v320 = vadd.f32 %v318, %v319
        %v321 = vmax.f32 %v320, 1e-12
        %v322 = vrsqrt.pop %v321
        %vm323 = vcmask 261120
        %v325 = vsel %vm323, %v303, 0
        %327 = vmatprep.subr.mxu0 0.0
        %328 = vmatpush1.msra.mxu0 %v304
        %329 = vmatprep.subr.mxu0 0.0
        %330 = vmatpush1.msra.mxu0 %v305
        %331 = vmatprep.subr.mxu0 0.0
        %332 = vmatpush1.msra.mxu0 %v306
        %333 = vmatprep.subr.mxu0 0.0
        %334 = vmatpush1.msra.mxu0 %v307
        %335 = vmatprep.subr.mxu0 0.0
        %336 = vmatpush1.msra.mxu0 0.0
        %337 = vmatprep.subr.mxu0 0.0
        %338 = vmatpush1.msra.mxu0 0.0
        %339 = vmatprep.subr.mxu0 0.0
        %340 = vmatpush1.msra.mxu0 0.0
        %341 = vmatprep.subr.mxu0 0.0
        %342 = vmatpush1.msra.mxu0 0.0
        %343 = vmatprep.subr.mxu0 0.0
        %344 = vmatpush1.msra.mxu0 0.0
        %345 = vmatprep.subr.mxu0 0.0
        %346 = vmatpush1.msra.mxu0 0.0
        %347 = vmatprep.subr.mxu0 0.0
        %348 = vmatpush1.msra.mxu0 0.0
        %349 = vmatprep.subr.mxu0 0.0
        %350 = vmatpush1.msra.mxu0 0.0
        %351 = vmatprep.subr.mxu0 0.0
        %352 = vmatpush1.msra.mxu0 0.0
        %353 = vmatprep.subr.mxu0 0.0
        %354 = vmatpush1.msra.mxu0 0.0
        %355 = vmatprep.subr.mxu0 0.0
        %356 = vmatpush1.msra.mxu0 0.0
        %357 = vmatprep.subr.mxu0 0.0
        %358 = vmatpush1.msra.mxu0 0.0
        %359 = vmatprep.subr.mxu0 0.0
        %360 = vmatpush1.msra.mxu0 0.0
        %361 = vmatprep.subr.mxu0 0.0
        %362 = vmatpush1.msra.mxu0 0.0
        %363 = vmatprep.subr.mxu0 0.0
        %364 = vmatpush1.msra.mxu0 0.0
        %365 = vmatprep.subr.mxu0 0.0
        %366 = vmatpush1.msra.mxu0 0.0
        %367 = vmatprep.subr.mxu0 0.0
        %368 = vmatpush1.msra.mxu0 0.0
        %369 = vmatprep.subr.mxu0 0.0
        %370 = vmatpush1.msra.mxu0 0.0
        %371 = vmatprep.subr.mxu0 0.0
        %372 = vmatpush1.msra.mxu0 0.0
        %373 = vmatprep.subr.mxu0 0.0
        %374 = vmatpush1.msra.mxu0 0.0
        %375 = vmatprep.subr.mxu0 0.0
        %376 = vmatpush1.msra.mxu0 0.0
        %377 = vmatprep.subr.mxu0 0.0
        %378 = vmatpush1.msra.mxu0 0.0
        %379 = vmatprep.subr.mxu0 0.0
        %380 = vmatpush1.msra.mxu0 0.0
        %381 = vmatprep.subr.mxu0 0.0
        %382 = vmatpush1.msra.mxu0 0.0
        %383 = vmatprep.subr.mxu0 0.0
        %384 = vmatpush1.msra.mxu0 0.0
        %385 = vmatprep.subr.mxu0 0.0
        %386 = vmatpush1.msra.mxu0 0.0
        %387 = vmatprep.subr.mxu0 0.0
        %388 = vmatpush1.msra.mxu0 0.0
        %389 = vmatprep.subr.mxu0 0.0
        %390 = vmatpush1.msra.mxu0 0.0
        %391 = vmatprep.mubr.f32.mxu0 0.0
        %392 = vmatmul.mubr.f32.gmra.mrb[0].mxu0 %v325
        %v393 = vpop.f32.mrb[0].mxu0
        %v394 = vadd.f32 0.0, %v393
        %v395 = vpop.f32.mrb[0].mxu0
        %396 = vdwg.mxu0
        %v397 = vmul.f32 %v394, %v322
        %v398 = vmax.f32 %v397, -1.0
        %v399 = vmin.f32 %v398, 1.0
        %v400 = vld [vmem:[%s302] sm:$0xff]
        %s401 = smul.u32 %s27, 128
        %v402 = vstv %s401
        %v403 = vsub.s32 %v400, %v402
        %v404 = vlaneseq
        %v405 = vand.u32 %v404, 127
        %406 = vset.pattern.permute.xlu0 0
        %407 = vperm.xlu0 %406, %v403
        %v408 = vpop.permute.xlu0 %407
        %vm409 = vcmp.eq.s32.totalorder %v405, %v408
        %v410 = vsel %vm409, %v399, 0.0
        %411 = vadd.xlane.f32.xlu0 %v410
        %v412 = vpop.xlane.xlu0 %411
        %v413 = vmul.f32 %v412, %v412
        %v414 = vsub.f32 1.0, %v413
        %v415 = vmax.f32 %v414, 0.0
        %v416 = vrsqrt.pop %v415
        %v417 = vmul.f32 %v415, %v416
        %vm418 = vcmp.eq.f32.partialorder %v415, inf
        %v419 = vsel %vm418, %v415, %v417
        %vm420 = vcmp.eq.f32.partialorder %v415, 0.0
        %v421 = vand.u32 %v415, 2147483648
        %v422 = vsel %vm420, %v421, %v419
        %v423 = vmul.f32 %v412, 0.87758255
        %v424 = vmul.f32 %v422, 0.47942555
        %v425 = vsub.f32 %v423, %v424
        %vm426 = vcmp.gt.f32.partialorder %v412, -0.87758255
        %v427 = vsub.f32 %v412, 0.23971277
        %v428 = vsel %vm426, %v425, %v427
        %v429 = vsel %vm409, %v428, %v399
        %v430 = vmul.f32 %v429, 64.0
        %431 = vst [vmem:[%s287] sm:$0xff] %v430
        %v432 = vmul.f32 %v399, 64.0
        %433 = vst [vmem:[%s294] sm:$0xff] %v432
        %s434 = sand.u32 %s122, 1
        %s435 = scalar_lea.sflag [#allocation4], %s434
        %s436 = sand.u32 %s122, 1
        %s437 = smul.addr %s436, 8
        %s438 = scalar_lea.vmem [#allocation3], %s437
        %s439 = sand.u32 %s150, 1
        %s440 = scalar_lea.sflag [#allocation6], %s439
        %s441 = sand.u32 %s150, 1
        %s442 = smul.addr %s441, 8
        %s443 = scalar_lea.vmem [#allocation5], %s442
        // Predicated region
        $region71: #{_arcface_forward_jit.1} parent=65 // pred_check
          %p444 = pneg %p132
        $region72: #{_arcface_forward_jit.1} parent=65 // pred_check_branch
          %446 = sbr.rel (%p444) target = $region74
        $region73: #{_arcface_forward_jit.1} parent=65 // pred_region
          %s448 = ssub.s32 128, 128
          %449 = vsyncadd %s435, %s448
          %s450 = smul.addr %s26, 2
          %s451 = sadd.s32 %s27, %s450
          %s452 = smul.addr %s451, 128
          %s453 = scalar_lea.hbm %s3, %s452
          %s455 = sshll.u32 %s438, 4
          %s456 = int_to_ptr.vmem [resolvable:$true] %s455
          %458 = dma.vmem_to_hbm [thread:$0]  %s456, 128, %s453, %s435
        $region74: #{_arcface_forward_jit.1} parent=65 // pred_fallthru
          _
        // Predicated region
        $region75: #{_arcface_forward_jit.1} parent=65 // pred_check
          %p459 = pneg %p160
        $region76: #{_arcface_forward_jit.1} parent=65 // pred_check_branch
          %461 = sbr.rel (%p459) target = $region78
        $region77: #{_arcface_forward_jit.1} parent=65 // pred_region
          %s463 = ssub.s32 128, 128
          %464 = vsyncadd %s440, %s463
          %s465 = smul.addr %s26, 2
          %s466 = sadd.s32 %s27, %s465
          %s467 = smul.addr %s466, 128
          %s468 = scalar_lea.hbm %s4, %s467
          %s470 = sshll.u32 %s443, 4
          %s471 = int_to_ptr.vmem [resolvable:$true] %s470
          %473 = dma.vmem_to_hbm [thread:$0]  %s471, 128, %s468, %s440
        $region78: #{_arcface_forward_jit.1} parent=65 // pred_fallthru
          _
      $region66: #{_arcface_forward_jit.1} parent=5 // pred_fallthru
        _
      %p474 = scmp.le.s32.totalorder 2, %s17
      // Predicated region
      $region79: #{_arcface_forward_jit.1} parent=5 // pred_check
        %p475 = pneg %p474
      $region80: #{_arcface_forward_jit.1} parent=5 // pred_check_branch
        %477 = sbr.rel (%p475) target = $region82
      $region81: #{_arcface_forward_jit.1} parent=5 // pred_region
        %s478 = ssub.s32 %s17, 2
        // Predicated region
        $region83: #{_arcface_forward_jit.1} parent=81 // pred_check
          %p479 = pneg %p138
        $region84: #{_arcface_forward_jit.1} parent=81 // pred_check_branch
          %481 = sbr.rel (%p479) target = $region86
        $region85: #{_arcface_forward_jit.1} parent=81 // pred_region
          %s482 = sand.u32 %s123, 1
          %s483 = scalar_lea.sflag [#allocation4], %s482
          %s484 = sand.u32 %s123, 1
          %s485 = smul.addr %s484, 8
          %s486 = scalar_lea.vmem [#allocation3], %s485
          %487 = dma.done %s483, 128
        $region86: #{_arcface_forward_jit.1} parent=81 // pred_fallthru
          _
        // Predicated region
        $region87: #{_arcface_forward_jit.1} parent=81 // pred_check
          %p488 = pneg %p166
        $region88: #{_arcface_forward_jit.1} parent=81 // pred_check_branch
          %490 = sbr.rel (%p488) target = $region90
        $region89: #{_arcface_forward_jit.1} parent=81 // pred_region
          %s491 = sand.u32 %s151, 1
          %s492 = scalar_lea.sflag [#allocation6], %s491
          %s493 = sand.u32 %s151, 1
          %s494 = smul.addr %s493, 8
          %s495 = scalar_lea.vmem [#allocation5], %s494
          %496 = dma.done %s492, 128
        $region90: #{_arcface_forward_jit.1} parent=81 // pred_fallthru
          _
      $region82: #{_arcface_forward_jit.1} parent=5 // pred_fallthru
        _
    $region6: #{_arcface_forward_jit.1} parent=1 // loop_footer
      %s21 = sadd.s32 1, %s17
    $region7: #{_arcface_forward_jit.1} parent=1 // loop_footer_branch
      %16 = sbr.rel target = $region3
    $region8: #{_arcface_forward_jit.1} parent=1 // loop_exit
      _
    %497 = vsyncpa [#allocation4], 1
    %s498 = scalar_lea.sflag [#allocation4], 1
    %499 = vsyncpa %s498, 1
    %500 = vsyncpa [#allocation6], 1
    %s501 = scalar_lea.sflag [#allocation6], 1
    %502 = vsyncpa %s501, 1

</llo_original>
